<compile_context>
chip_gen: v7x
topology: tpu7x:2x2x1
jax: 0.10.0
libtpu: 0.0.40
codegen_flags: <defaults>
</compile_context>

<pallas_src>
import functools
import math

import jax
import jax.numpy as jnp
from jax import lax
from jax.experimental import pallas as pl
from jax.experimental.pallas import tpu as pltpu


def _tap_masks(C_in, L, K, pad):
    """Per-tap lane masks implementing the conv's zero padding (hoisted per kernel body)."""
    lane = lax.broadcasted_iota(jnp.int32, (C_in, L), 1)
    masks = []
    for k in range(K):
        d = k - pad
        if d == 0:
            masks.append(None)
        elif d > 0:
            masks.append(lane < L - d)
        else:
            masks.append(lane >= -d)
    return masks


def _conv_sample(xn, w, masks, *, K, pad):
    """Conv1d (stride=1, zero padding) for one sample, channels on sublanes.

    xn: (C_in, L) input tile, w: (K, C_out, C_in) loaded weight value.
    Returns (C_out, L) float32; only lanes [0, L + 2*pad - K] are valid conv outputs.
    K shallow MXU dots fed straight from vregs (no VMEM im2col staging / reload).
    """
    _, L = xn.shape
    acc = None
    for k in range(K):                       # K is a small static constant (3)
        d = k - pad                          # tap k reads x[:, l + d]
        piece = xn
        if d != 0:
            piece = pltpu.roll(xn, (-d) % L, 1)          # XLU lane rotation
            piece = jnp.where(masks[k], piece, jnp.zeros_like(piece))
        part = jnp.dot(w[k], piece, preferred_element_type=jnp.float32)
        acc = part if acc is None else acc + part
    return acc


def _stats_kernel(x_ref, w_ref, stats_ref, *, K, pad, L_out):
    """Pass 1: accumulate per-channel [sum, sum-of-squares] of the conv output.

    stats_ref is a (1, C_out, 2) block whose index depends only on the leading
    ("parallel") core-split axis, so it stays VMEM-resident across the inner
    "arbitrary" batch-tile axis and is written back to HBM once per split.
    """
    TN, C_in, L = x_ref.shape

    @pl.when(pl.program_id(1) == 0)
    def _():
        stats_ref[...] = jnp.zeros_like(stats_ref)

    w = w_ref[...]
    masks = _tap_masks(C_in, L, K, pad)
    s = None
    q = None
    for n in range(TN):                      # static unroll; TN is capped small
        conv = _conv_sample(x_ref[n], w, masks, K=K, pad=pad)[:, :L_out]
        cs = jnp.sum(conv, axis=-1, keepdims=True)             # (C_out, 1)
        cq = jnp.sum(conv * conv, axis=-1, keepdims=True)      # (C_out, 1)
        s = cs if s is None else s + cs
        q = cq if q is None else q + cq
    stats_ref[0] = stats_ref[0] + jnp.concatenate([s, q], axis=1)


def _apply_kernel(x_ref, w_ref, shift_ref, o_ref, *, K, pad, L_out):
    """Pass 2: conv with BN-pre-scaled weights -> add shift -> ReLU -> NCW output tile."""
    TN, C_in, L = x_ref.shape
    w = w_ref[...]
    shift = shift_ref[...]                   # (C_out, 1), f32
    masks = _tap_masks(C_in, L, K, pad)
    for n in range(TN):
        conv = _conv_sample(x_ref[n], w, masks, K=K, pad=pad)[:, :L_out]
        o_ref[n] = jnp.maximum(conv + shift, 0.0).astype(o_ref.dtype)


def _vmem_limit_bytes():
    """Generation-aware scoped-VMEM limit (v7x: 64 MiB physical, v5e/v6e: 128 MiB)."""
    cap = 64 * 1024 * 1024
    try:
        info = pltpu.get_tpu_info()
        cap = int(getattr(info, "vmem_capacity_bytes", cap) or cap)
    except Exception:
        pass
    # ~60% of physical: ~38 MiB on v7x, ~76 MiB on v5e/v6e; never above 100 MiB.
    return int(min(cap * 0.6, 100 * 1024 * 1024))


def _pick_tile_n(N, C_in, C_out, L, L_out, itemsize, vmem_limit):
    """Samples per grid step: large enough to amortize per-step overhead and keep the
    MXU / store path lane-dense, small enough to keep double-buffered blocks well
    inside the (generation-dependent) VMEM budget and the static unroll short."""
    per_sample = (2 * itemsize * C_in * L            # x block, double-buffered
                  + 2 * itemsize * C_out * L_out     # output block, double-buffered
                  + 4 * 4 * C_out * L)               # f32 conv temps / headroom
    budget = vmem_limit // 2                         # keep half the limit as headroom
    tn = max(1, min(N, budget // max(per_sample, 1), 16))
    while N % tn:                                    # divisor of N: no remainder tiles
        tn -= 1
    return int(tn)


def common_1d_forward(x, weight, bias, gamma, beta, *, padding=1, stride=1, eps=1e-5):
    """Forward of Common_1d.  x: (N, C_in, L) NCW -> (N, C_out, L_out) NCW.

    `bias` is accepted for parity with nn.Conv1d but unused: BatchNorm1d in training
    mode subtracts the per-channel batch mean, which cancels a per-channel bias exactly.
    """
    del bias
    N, C_in, L = x.shape
    C_out, c_in_w, K = weight.shape
    assert c_in_w == C_in
    assert stride == 1, "kernel implements the module's default stride=1"
    L_out = L + 2 * padding - K + 1
    assert 0 < L_out <= L, "in-kernel windows assume 2*padding <= kernel_size - 1"

    # One-time tiny weight re-layout: (C_out, C_in, K) -> (K, C_out, C_in), tap-major.
    w_taps = jnp.transpose(weight, (2, 0, 1)).astype(x.dtype)

    itemsize = jnp.dtype(x.dtype).itemsize
    vmem_limit = _vmem_limit_bytes()
    TN = _pick_tile_n(N, C_in, C_out, L, L_out, itemsize, vmem_limit)
    n_tiles = N // TN
    # Split pass-1's batch-tile reduction into two partial stats blocks so v7x's two
    # TensorCores both get work; v5e/v6e simply iterate the leading "parallel" axis.
    NSPLIT = 2 if (n_tiles % 2 == 0 and n_tiles >= 2) else 1
    tiles_per_split = n_tiles // NSPLIT

    conv_flops = 2 * int(N) * int(C_out) * int(L) * int(K) * int(C_in)

    # ---- pass 1: per-channel conv sum / sum-of-squares (grid-level accumulator) ----
    stats = pl.pallas_call(
        functools.partial(_stats_kernel, K=K, pad=padding, L_out=L_out),
        out_shape=jax.ShapeDtypeStruct((NSPLIT, C_out, 2), jnp.float32),
        grid_spec=pltpu.PrefetchScalarGridSpec(
            num_scalar_prefetch=0,
            grid=(NSPLIT, tiles_per_split),
            in_specs=[
                pl.BlockSpec((TN, C_in, L),
                             lambda s, t: (s * tiles_per_split + t, 0, 0)),
                pl.BlockSpec((K, C_out, C_in), lambda s, t: (0, 0, 0)),
            ],
            out_specs=pl.BlockSpec((1, C_out, 2), lambda s, t: (s, 0, 0))),
        compiler_params=pltpu.CompilerParams(
            dimension_semantics=("parallel", "arbitrary"),
            vmem_limit_bytes=vmem_limit),
        cost_estimate=pl.CostEstimate(
            flops=conv_flops + 3 * N * C_out * L_out,
            transcendentals=0,
            bytes_accessed=int(itemsize * x.size + itemsize * w_taps.size
                               + 4 * NSPLIT * C_out * 2)),
    )(x, w_taps)

    # ---- tiny (C_out,) finalization in plain JAX: mean/var -> folded scale/shift ----
    stats_tot = jnp.sum(stats, axis=0)                         # (C_out, 2)
    count = jnp.float32(N * L_out)
    mean = stats_tot[:, 0] / count                             # (C_out,)
    # One-pass biased variance in f32; clamp guards tiny negatives from cancellation.
    var = jnp.maximum(stats_tot[:, 1] / count - mean * mean, 0.0)
    inv = lax.rsqrt(var + eps)
    scale = gamma.astype(jnp.float32) * inv                    # (C_out,)
    shift = (beta.astype(jnp.float32) - mean * scale).reshape(C_out, 1)
    # Fold the BN scale into the conv weights so the pass-2 epilogue is add + ReLU only.
    w_scaled = (w_taps.astype(jnp.float32) * scale[None, :, None]).astype(x.dtype)

    # ---- pass 2: conv (pre-scaled weights) -> + shift -> ReLU -> NCW output ----
    out = pl.pallas_call(
        functools.partial(_apply_kernel, K=K, pad=padding, L_out=L_out),
        out_shape=jax.ShapeDtypeStruct((N, C_out, L_out), x.dtype),
        grid_spec=pltpu.PrefetchScalarGridSpec(
            num_scalar_prefetch=0,
            grid=(n_tiles,),
            in_specs=[
                pl.BlockSpec((TN, C_in, L), lambda t: (t, 0, 0)),
                pl.BlockSpec((K, C_out, C_in), lambda t: (0, 0, 0)),
                pl.BlockSpec((C_out, 1), lambda t: (0, 0)),
            ],
            out_specs=pl.BlockSpec((TN, C_out, L_out), lambda t: (t, 0, 0))),
        compiler_params=pltpu.CompilerParams(
            dimension_semantics=("parallel",),
            vmem_limit_bytes=vmem_limit),
        cost_estimate=pl.CostEstimate(
            flops=conv_flops + 2 * N * C_out * L_out,
            transcendentals=0,
            bytes_accessed=int(itemsize * x.size + itemsize * w_scaled.size
                               + 4 * C_out + itemsize * N * C_out * L_out)),
    )(x, w_scaled, shift)
    return out


def reference(x, weight, bias, gamma, beta, padding=1, eps=1e-5):
    """Pure-JAX reference of the PyTorch forward (training-mode BN), with conv bias."""
    y = lax.conv_general_dilated(
        x, weight, window_strides=(1,), padding=[(padding, padding)],
        dimension_numbers=("NCH", "OIH", "NCH"),
        precision=lax.Precision.HIGHEST)
    y = y + bias[None, :, None]
    mean = jnp.mean(y, axis=(0, 2), keepdims=True)
    var = jnp.mean((y - mean) ** 2, axis=(0, 2), keepdims=True)
    y = (y - mean) * lax.rsqrt(var + eps)
    y = y * gamma[None, :, None] + beta[None, :, None]
    return jnp.maximum(y, 0.0)


if __name__ == "__main__":
    # Small shapes consistent with the module: Conv1d over (N, C_in, L).
    N, C_in, C_out, L, K, PAD = 2, 4, 8, 16, 3, 1

    key = jax.random.PRNGKey(0)
    kx, kw, kb, kg, kbe = jax.random.split(key, 5)

    x = jax.random.normal(kx, (N, C_in, L), dtype=jnp.float32)

    # PyTorch-style Conv1d init: U(-1/sqrt(fan_in), 1/sqrt(fan_in)).
    bound = 1.0 / math.sqrt(C_in * K)
    weight = jax.random.uniform(kw, (C_out, C_in, K), jnp.float32, -bound, bound)
    bias = jax.random.uniform(kb, (C_out,), jnp.float32, -bound, bound)
    # BatchNorm1d affine params (non-trivial values to exercise the folded scale/shift).
    gamma = 1.0 + 0.1 * jax.random.normal(kg, (C_out,), jnp.float32)
    beta = 0.1 * jax.random.normal(kbe, (C_out,), jnp.float32)

    out = common_1d_forward(x, weight, bias, gamma, beta, padding=PAD)
    out = jax.block_until_ready(out)

    ref = reference(x, weight, bias, gamma, beta, padding=PAD)
    assert out.shape == ref.shape == (N, C_out, L), out.shape
    err = jnp.max(jnp.abs(out - ref))
    assert jnp.allclose(out, ref, rtol=1e-4, atol=1e-4), f"max abs err {err}"

    print("KERNEL_OK")
</pallas_src>

<mosaic_0001>
module attributes {stable_mosaic.version = 11 : i64} {
  func.func @_stats_kernel(%arg0: i32, %arg1: i32, %arg2: memref<2x4x16xf32, #tpu.memory_space<vmem>>, %arg3: memref<3x8x4xf32, #tpu.memory_space<vmem>>, %arg4: memref<1x8x2xf32, #tpu.memory_space<vmem>>) attributes {dimension_semantics = [#tpu.dimension_semantics<parallel>, #tpu.dimension_semantics<arbitrary>], iteration_bounds = array<i64: 1, 1>, scalar_prefetch = 0 : i64, scratch_operands = 0 : i64, tpu.core_type = #tpu.core_type<tc>, window_params = [{transform_indices = @transform_0, window_bounds = array<i64: 2, 4, 16>}, {pipeline_mode = #tpu.pipeline_mode<synchronous>, transform_indices = @transform_1, window_bounds = array<i64: 3, 8, 4>}, {transform_indices = @transform_2, window_bounds = array<i64: 1, 8, 2>}]} {
    %c0_i32 = arith.constant 0 : i32
    %0 = arith.cmpi eq, %arg1, %c0_i32 : i32
    %1 = arith.extui %0 : i1 to i32
    %c0_i32_0 = arith.constant 0 : i32
    %2 = arith.cmpi ne, %1, %c0_i32_0 : i32
    scf.if %2 {
      %cst_31 = arith.constant 0.000000e+00 : f32
      %66 = vector.broadcast %cst_31 : f32 to vector<1x8x2xf32>
      %c0_32 = arith.constant 0 : index
      %c0_33 = arith.constant 0 : index
      %c0_34 = arith.constant 0 : index
      %67 = vector.load %arg4[%c0_32, %c0_33, %c0_34] : memref<1x8x2xf32, #tpu.memory_space<vmem>>, vector<1x8x2xf32>
      tpu.vector_store %arg4[%c0_32, %c0_33, %c0_34], %66 {strides = array<i32>} : memref<1x8x2xf32, #tpu.memory_space<vmem>>, vector<1x8x2xf32>,
    } else {
    }
    %c0 = arith.constant 0 : index
    %c0_1 = arith.constant 0 : index
    %c0_2 = arith.constant 0 : index
    %3 = vector.load %arg3[%c0, %c0_1, %c0_2] : memref<3x8x4xf32, #tpu.memory_space<vmem>>, vector<3x8x4xf32>
    %4 = tpu.iota {dimensions = array<i32: 1>} : vector<4x16xi32>
    %c1_i32 = arith.constant 1 : i32
    %5 = vector.broadcast %c1_i32 : i32 to vector<4x16xi32>
    %6 = arith.cmpi sge, %4, %5 : vector<4x16xi32>
    %c15_i32 = arith.constant 15 : i32
    %7 = vector.broadcast %c15_i32 : i32 to vector<4x16xi32>
    %8 = arith.cmpi slt, %4, %7 : vector<4x16xi32>
    %c0_3 = arith.constant 0 : index
    %c0_4 = arith.constant 0 : index
    %c0_5 = arith.constant 0 : index
    %9 = vector.load %arg2[%c0_3, %c0_4, %c0_5] : memref<2x4x16xf32, #tpu.memory_space<vmem>>, vector<1x4x16xf32>
    %10 = vector.shape_cast %9 : vector<1x4x16xf32> to vector<4x16xf32>
    %c1_i32_6 = arith.constant 1 : i32
    %11 = tpu.dynamic_rotate %10 by %c1_i32_6 dim 1 : vector<4x16xf32>, i32 -> vector<4x16xf32>
    %cst = arith.constant 0.000000e+00 : f32
    %12 = vector.broadcast %cst : f32 to vector<4x16xf32>
    %13 = arith.select %6, %11, %12 : vector<4x16xi1>, vector<4x16xf32>
    %14 = vector.extract_strided_slice %3 {offsets = [0, 0, 0], sizes = [1, 8, 4], strides = [1, 1, 1]} : vector<3x8x4xf32> to vector<1x8x4xf32>
    %15 = vector.shape_cast %14 : vector<1x8x4xf32> to vector<8x4xf32>
    %cst_7 = arith.constant dense<0.000000e+00> : vector<8x16xf32>
    %16 = tpu.matmul %15, %13, %cst_7 {dimension_numbers = #tpu.dot_dimension_numbers<[1], [0], [0], [1], [0, 0, 1, 1], [], []>} : vector<8x4xf32>, vector<4x16xf32>, vector<8x16xf32> -> vector<8x16xf32>
    %17 = vector.extract_strided_slice %3 {offsets = [1, 0, 0], sizes = [1, 8, 4], strides = [1, 1, 1]} : vector<3x8x4xf32> to vector<1x8x4xf32>
    %18 = vector.shape_cast %17 : vector<1x8x4xf32> to vector<8x4xf32>
    %cst_8 = arith.constant dense<0.000000e+00> : vector<8x16xf32>
    %19 = tpu.matmul %18, %10, %cst_8 {dimension_numbers = #tpu.dot_dimension_numbers<[1], [0], [0], [1], [0, 0, 1, 1], [], []>} : vector<8x4xf32>, vector<4x16xf32>, vector<8x16xf32> -> vector<8x16xf32>
    %20 = arith.addf %16, %19 : vector<8x16xf32>
    %c15_i32_9 = arith.constant 15 : i32
    %21 = tpu.dynamic_rotate %10 by %c15_i32_9 dim 1 : vector<4x16xf32>, i32 -> vector<4x16xf32>
    %cst_10 = arith.constant 0.000000e+00 : f32
    %22 = vector.broadcast %cst_10 : f32 to vector<4x16xf32>
    %23 = arith.select %8, %21, %22 : vector<4x16xi1>, vector<4x16xf32>
    %24 = vector.extract_strided_slice %3 {offsets = [2, 0, 0], sizes = [1, 8, 4], strides = [1, 1, 1]} : vector<3x8x4xf32> to vector<1x8x4xf32>
    %25 = vector.shape_cast %24 : vector<1x8x4xf32> to vector<8x4xf32>
    %cst_11 = arith.constant dense<0.000000e+00> : vector<8x16xf32>
    %26 = tpu.matmul %25, %23, %cst_11 {dimension_numbers = #tpu.dot_dimension_numbers<[1], [0], [0], [1], [0, 0, 1, 1], [], []>} : vector<8x4xf32>, vector<4x16xf32>, vector<8x16xf32> -> vector<8x16xf32>
    %27 = arith.addf %20, %26 : vector<8x16xf32>
    %cst_12 = arith.constant dense<0.000000e+00> : vector<8xf32>
    %28 = vector.multi_reduction <add>, %27, %cst_12 [1] : vector<8x16xf32> to vector<8xf32>
    %29 = vector.shape_cast %28 : vector<8xf32> to vector<8x1xf32>
    %30 = arith.mulf %27, %27 : vector<8x16xf32>
    %cst_13 = arith.constant dense<0.000000e+00> : vector<8xf32>
    %31 = vector.multi_reduction <add>, %30, %cst_13 [1] : vector<8x16xf32> to vector<8xf32>
    %32 = vector.shape_cast %31 : vector<8xf32> to vector<8x1xf32>
    %c1 = arith.constant 1 : index
    %c0_14 = arith.constant 0 : index
    %c0_15 = arith.constant 0 : index
    %33 = vector.load %arg2[%c1, %c0_14, %c0_15] : memref<2x4x16xf32, #tpu.memory_space<vmem>>, vector<1x4x16xf32>
    %34 = vector.shape_cast %33 : vector<1x4x16xf32> to vector<4x16xf32>
    %c1_i32_16 = arith.constant 1 : i32
    %35 = tpu.dynamic_rotate %34 by %c1_i32_16 dim 1 : vector<4x16xf32>, i32 -> vector<4x16xf32>
    %cst_17 = arith.constant 0.000000e+00 : f32
    %36 = vector.broadcast %cst_17 : f32 to vector<4x16xf32>
    %37 = arith.select %6, %35, %36 : vector<4x16xi1>, vector<4x16xf32>
    %38 = vector.extract_strided_slice %3 {offsets = [0, 0, 0], sizes = [1, 8, 4], strides = [1, 1, 1]} : vector<3x8x4xf32> to vector<1x8x4xf32>
    %39 = vector.shape_cast %38 : vector<1x8x4xf32> to vector<8x4xf32>
    %cst_18 = arith.constant dense<0.000000e+00> : vector<8x16xf32>
    %40 = tpu.matmul %39, %37, %cst_18 {dimension_numbers = #tpu.dot_dimension_numbers<[1], [0], [0], [1], [0, 0, 1, 1], [], []>} : vector<8x4xf32>, vector<4x16xf32>, vector<8x16xf32> -> vector<8x16xf32>
    %41 = vector.extract_strided_slice %3 {offsets = [1, 0, 0], sizes = [1, 8, 4], strides = [1, 1, 1]} : vector<3x8x4xf32> to vector<1x8x4xf32>
    %42 = vector.shape_cast %41 : vector<1x8x4xf32> to vector<8x4xf32>
    %cst_19 = arith.constant dense<0.000000e+00> : vector<8x16xf32>
    %43 = tpu.matmul %42, %34, %cst_19 {dimension_numbers = #tpu.dot_dimension_numbers<[1], [0], [0], [1], [0, 0, 1, 1], [], []>} : vector<8x4xf32>, vector<4x16xf32>, vector<8x16xf32> -> vector<8x16xf32>
    %44 = arith.addf %40, %43 : vector<8x16xf32>
    %c15_i32_20 = arith.constant 15 : i32
    %45 = tpu.dynamic_rotate %34 by %c15_i32_20 dim 1 : vector<4x16xf32>, i32 -> vector<4x16xf32>
    %cst_21 = arith.constant 0.000000e+00 : f32
    %46 = vector.broadcast %cst_21 : f32 to vector<4x16xf32>
    %47 = arith.select %8, %45, %46 : vector<4x16xi1>, vector<4x16xf32>
    %48 = vector.extract_strided_slice %3 {offsets = [2, 0, 0], sizes = [1, 8, 4], strides = [1, 1, 1]} : vector<3x8x4xf32> to vector<1x8x4xf32>
    %49 = vector.shape_cast %48 : vector<1x8x4xf32> to vector<8x4xf32>
    %cst_22 = arith.constant dense<0.000000e+00> : vector<8x16xf32>
    %50 = tpu.matmul %49, %47, %cst_22 {dimension_numbers = #tpu.dot_dimension_numbers<[1], [0], [0], [1], [0, 0, 1, 1], [], []>} : vector<8x4xf32>, vector<4x16xf32>, vector<8x16xf32> -> vector<8x16xf32>
    %51 = arith.addf %44, %50 : vector<8x16xf32>
    %cst_23 = arith.constant dense<0.000000e+00> : vector<8xf32>
    %52 = vector.multi_reduction <add>, %51, %cst_23 [1] : vector<8x16xf32> to vector<8xf32>
    %53 = vector.shape_cast %52 : vector<8xf32> to vector<8x1xf32>
    %54 = arith.mulf %51, %51 : vector<8x16xf32>
    %cst_24 = arith.constant dense<0.000000e+00> : vector<8xf32>
    %55 = vector.multi_reduction <add>, %54, %cst_24 [1] : vector<8x16xf32> to vector<8xf32>
    %56 = vector.shape_cast %55 : vector<8xf32> to vector<8x1xf32>
    %57 = arith.addf %29, %53 : vector<8x1xf32>
    %58 = arith.addf %32, %56 : vector<8x1xf32>
    %c0_25 = arith.constant 0 : index
    %c0_26 = arith.constant 0 : index
    %c0_27 = arith.constant 0 : index
    %59 = vector.load %arg4[%c0_25, %c0_26, %c0_27] : memref<1x8x2xf32, #tpu.memory_space<vmem>>, vector<1x8x2xf32>
    %60 = vector.shape_cast %59 : vector<1x8x2xf32> to vector<8x2xf32>
    %61 = tpu.concatenate %57, %58 in 1 : vector<8x1xf32>, vector<8x1xf32> -> vector<8x2xf32>
    %62 = arith.addf %60, %61 : vector<8x2xf32>
    %c0_28 = arith.constant 0 : index
    %c0_29 = arith.constant 0 : index
    %c0_30 = arith.constant 0 : index
    %63 = vector.load %arg4[%c0_28, %c0_29, %c0_30] : memref<1x8x2xf32, #tpu.memory_space<vmem>>, vector<1x8x2xf32>
    %64 = vector.shape_cast %63 : vector<1x8x2xf32> to vector<8x2xf32>
    %65 = vector.shape_cast %62 : vector<8x2xf32> to vector<1x8x2xf32>
    tpu.vector_store %arg4[%c0_28, %c0_29, %c0_30], %65 {strides = array<i32>} : memref<1x8x2xf32, #tpu.memory_space<vmem>>, vector<1x8x2xf32>,
    return
  }
  func.func @transform_0(%arg0: i32, %arg1: i32) -> (i32, i32, i32) {
    %c1_i32 = arith.constant 1 : i32
    %0 = arith.muli %arg0, %c1_i32 : i32
    %1 = arith.addi %0, %arg1 : i32
    %c0_i32 = arith.constant 0 : i32
    %c0_i32_0 = arith.constant 0 : i32
    %c0_i32_1 = arith.constant 0 : i32
    return %1, %c0_i32, %c0_i32_0 : i32, i32, i32
  }
  func.func @transform_1(%arg0: i32, %arg1: i32) -> (i32, i32, i32) {
    %c0_i32 = arith.constant 0 : i32
    %c0_i32_0 = arith.constant 0 : i32
    %c0_i32_1 = arith.constant 0 : i32
    %c0_i32_2 = arith.constant 0 : i32
    return %c0_i32, %c0_i32_0, %c0_i32_1 : i32, i32, i32
  }
  func.func @transform_2(%arg0: i32, %arg1: i32) -> (i32, i32, i32) {
    %c0_i32 = arith.constant 0 : i32
    %c0_i32_0 = arith.constant 0 : i32
    %c0_i32_1 = arith.constant 0 : i32
    return %arg0, %c0_i32, %c0_i32_0 : i32, i32, i32
  }
}

</mosaic_0001>

<llo_original>
// kernel: tpu_custom_call.1
$region0: #{tpu_custom_call.1}
  #allocation0 [shape = 'u32[]', space=smem, size = 0x4, offset = 0x4, fixed_abs, tag = 'smem constant byte address 0x4 - core index']
  #allocation1 [shape = 'u32[144,128]{1,0:T(1,128)}', space=vmem, size = 0x12000, scoped, tag = 'internal scratch']
  %s0 = inlined_call_operand.vmem [shape: f32[2,4,16], index: 0, kind: input, shape index: {}]
  %s1 = inlined_call_operand.vmem [shape: f32[3,8,4], index: 1, kind: input, shape index: {}]
  %s2 = inlined_call_operand.vmem [shape: f32[1,8,2], index: 2, kind: output, shape index: {}]
  %s3 = sld [smem:[#allocation0]]
  $region22: #{tpu_custom_call.1} parent=0
    _
  %s5 = ssub.s32 1, %s3
  %s6 = scalar_select 0, %s5, %s3
  // Predicated region
  $region2: #{tpu_custom_call.1} parent=0 // pred_check
    _
  $region3: #{tpu_custom_call.1} parent=0 // pred_check_branch
    %8 = sbr.rel (0) target = $region5
  $region4: #{tpu_custom_call.1} parent=0 // pred_region
    %s9 = sadd.s32 0, 0
    %s10 = smul.u32 2, %s9
    %p11 = scmp.lt.s32.totalorder %s10, 1
    %s12 = scalar_select %p11, %s10, 1
    %s13 = smul.addr %s12, 4
    %s14 = scalar_lea.vmem %s0, %s13
    %s15 = sadd.s32 0, 0
    %s16 = smul.u32 2, %s15
  $region5: #{tpu_custom_call.1} parent=0 // pred_fallthru
    _
  // Predicated region
  $region6: #{tpu_custom_call.1} parent=0 // pred_check
    _
  $region7: #{tpu_custom_call.1} parent=0 // pred_check_branch
    %18 = sbr.rel (0) target = $region9
  $region8: #{tpu_custom_call.1} parent=0 // pred_region
    _
  $region9: #{tpu_custom_call.1} parent=0 // pred_fallthru
    _
  %s19 = sadd.s32 0, 0
  %s20 = smul.u32 2, %s19
  %p21 = scmp.lt.s32.totalorder %s20, 1
  %s22 = scalar_select %p21, %s20, 1
  %s23 = smul.addr %s22, 4
  %s24 = scalar_lea.vmem %s0, %s23
  %s25 = sadd.s32 0, 0
  %s26 = smul.u32 2, %s25
  %p27 = scmp.lt.s32.totalorder %s26, 1
  %s28 = scalar_select %p27, %s26, 1
  %s29 = smul.addr %s28, 4
  %s30 = scalar_lea.vmem %s0, %s29
  %s31 = sadd.s32 0, 0
  %s32 = smul.u32 2, %s31
  %p33 = scmp.eq.s32.totalorder 0, 0
  // Predicated region
  $region10: #{tpu_custom_call.1} parent=0 // pred_check
    %p34 = pneg %p33
  $region11: #{tpu_custom_call.1} parent=0 // pred_check_branch
    %36 = sbr.rel (%p34) target = $region13
  $region12: #{tpu_custom_call.1} parent=0 // pred_region
    %vm37 = vcmask 15360
    %38 = vst.msk [vmem:[%s2] sm:$0xff] %vm37, 0.0
  $region13: #{tpu_custom_call.1} parent=0 // pred_fallthru
    _
  %v39 = vld [vmem:[%s1] sm:$0xff]
  %v40 = vld [vmem:[%s1 + $0x8] sm:$0xff]
  %v41 = vld [vmem:[%s1 + $0x10] sm:$0xff]
  %v42 = vlaneseq
  %v43 = vand.u32 %v42, 127
  %vm44 = vcmp.ge.s32.totalorder %v43, 1
  %vm45 = vcmp.lt.s32.totalorder %v43, 15
  %v46 = vld [vmem:[%s30] sm:$0xf]
  %vm47 = vcmask 1047680
  %48 = vrot.lane.b32.xlu0 %v46, 16
  %v49 = vpop.permute.xlu0 %48
  %v50 = vsel %vm47, %v49, %v46
  %51 = vrot.lane.b32.xlu0 %v50, 16
  %v52 = vpop.permute.xlu0 %51
  %v53 = vsel %vm47, %v52, %v46
  %55 = vrot.lane.b32.xlu0 %v53, 113
  %v56 = vpop.permute.xlu0 %55
  %v58 = vsel %vm44, %v56, 0.0
  %vm59 = vcmask 31744
  %v61 = vsel %vm59, %v40, 0
  %vm63 = vcmask 1043456
  %v65 = vsel %vm63, %v46, 0
  %67 = vmatprep.subr.mxu0 0.0
  %68 = vmatpush1.msra.mxu0 %v65
  %69 = vmatprep.subr.mxu0 0.0
  %70 = vmatpush1.msra.mxu0 0.0
  %71 = vmatprep.subr.mxu0 0.0
  %72 = vmatpush1.msra.mxu0 0.0
  %73 = vmatprep.subr.mxu0 0.0
  %74 = vmatpush1.msra.mxu0 0.0
  %75 = vmatprep.subr.mxu0 0.0
  %76 = vmatpush1.msra.mxu0 0.0
  %77 = vmatprep.subr.mxu0 0.0
  %78 = vmatpush1.msra.mxu0 0.0
  %79 = vmatprep.subr.mxu0 0.0
  %80 = vmatpush1.msra.mxu0 0.0
  %81 = vmatprep.subr.mxu0 0.0
  %82 = vmatpush1.msra.mxu0 0.0
  %83 = vmatprep.subr.mxu0 0.0
  %84 = vmatpush1.msra.mxu0 0.0
  %85 = vmatprep.subr.mxu0 0.0
  %86 = vmatpush1.msra.mxu0 0.0
  %87 = vmatprep.subr.mxu0 0.0
  %88 = vmatpush1.msra.mxu0 0.0
  %89 = vmatprep.subr.mxu0 0.0
  %90 = vmatpush1.msra.mxu0 0.0
  %91 = vmatprep.subr.mxu0 0.0
  %92 = vmatpush1.msra.mxu0 0.0
  %93 = vmatprep.subr.mxu0 0.0
  %94 = vmatpush1.msra.mxu0 0.0
  %95 = vmatprep.subr.mxu0 0.0
  %96 = vmatpush1.msra.mxu0 0.0
  %97 = vmatprep.subr.mxu0 0.0
  %98 = vmatpush1.msra.mxu0 0.0
  %99 = vmatprep.subr.mxu0 0.0
  %100 = vmatpush1.msra.mxu0 0.0
  %101 = vmatprep.subr.mxu0 0.0
  %102 = vmatpush1.msra.mxu0 0.0
  %103 = vmatprep.subr.mxu0 0.0
  %104 = vmatpush1.msra.mxu0 0.0
  %105 = vmatprep.subr.mxu0 0.0
  %106 = vmatpush1.msra.mxu0 0.0
  %107 = vmatprep.subr.mxu0 0.0
  %108 = vmatpush1.msra.mxu0 0.0
  %109 = vmatprep.subr.mxu0 0.0
  %110 = vmatpush1.msra.mxu0 0.0
  %111 = vmatprep.subr.mxu0 0.0
  %112 = vmatpush1.msra.mxu0 0.0
  %113 = vmatprep.subr.mxu0 0.0
  %114 = vmatpush1.msra.mxu0 0.0
  %115 = vmatprep.subr.mxu0 0.0
  %116 = vmatpush1.msra.mxu0 0.0
  %117 = vmatprep.subr.mxu0 0.0
  %118 = vmatpush1.msra.mxu0 0.0
  %119 = vmatprep.subr.mxu0 0.0
  %120 = vmatpush1.msra.mxu0 0.0
  %121 = vmatprep.subr.mxu0 0.0
  %122 = vmatpush1.msra.mxu0 0.0
  %123 = vmatprep.subr.mxu0 0.0
  %124 = vmatpush1.msra.mxu0 0.0
  %125 = vmatprep.subr.mxu0 0.0
  %126 = vmatpush1.msra.mxu0 0.0
  %127 = vmatprep.subr.mxu0 0.0
  %128 = vmatpush1.msra.mxu0 0.0
  %129 = vmatprep.subr.mxu0 0.0
  %130 = vmatpush1.msra.mxu0 0.0
  %131 = vmatprep.mubr.f32.mxu0 0.0
  %132 = vmatmul.mubr.f32.gmra.mrb[0].mxu0 %v61
  %v133 = vpop.f32.mrb[0].mxu0
  %v134 = vadd.f32 0.0, %v133
  %v135 = vpop.f32.mrb[0].mxu0
  %136 = vdwg.mxu0
  %v138 = vsel %vm59, %v39, 0
  %v141 = vsel %vm63, %v58, 0
  %143 = vmatprep.subr.mxu0 0.0
  %144 = vmatpush1.msra.mxu0 %v141
  %145 = vmatprep.subr.mxu0 0.0
  %146 = vmatpush1.msra.mxu0 0.0
  %147 = vmatprep.subr.mxu0 0.0
  %148 = vmatpush1.msra.mxu0 0.0
  %149 = vmatprep.subr.mxu0 0.0
  %150 = vmatpush1.msra.mxu0 0.0
  %151 = vmatprep.subr.mxu0 0.0
  %152 = vmatpush1.msra.mxu0 0.0
  %153 = vmatprep.subr.mxu0 0.0
  %154 = vmatpush1.msra.mxu0 0.0
  %155 = vmatprep.subr.mxu0 0.0
  %156 = vmatpush1.msra.mxu0 0.0
  %157 = vmatprep.subr.mxu0 0.0
  %158 = vmatpush1.msra.mxu0 0.0
  %159 = vmatprep.subr.mxu0 0.0
  %160 = vmatpush1.msra.mxu0 0.0
  %161 = vmatprep.subr.mxu0 0.0
  %162 = vmatpush1.msra.mxu0 0.0
  %163 = vmatprep.subr.mxu0 0.0
  %164 = vmatpush1.msra.mxu0 0.0
  %165 = vmatprep.subr.mxu0 0.0
  %166 = vmatpush1.msra.mxu0 0.0
  %167 = vmatprep.subr.mxu0 0.0
  %168 = vmatpush1.msra.mxu0 0.0
  %169 = vmatprep.subr.mxu0 0.0
  %170 = vmatpush1.msra.mxu0 0.0
  %171 = vmatprep.subr.mxu0 0.0
  %172 = vmatpush1.msra.mxu0 0.0
  %173 = vmatprep.subr.mxu0 0.0
  %174 = vmatpush1.msra.mxu0 0.0
  %175 = vmatprep.subr.mxu0 0.0
  %176 = vmatpush1.msra.mxu0 0.0
  %177 = vmatprep.subr.mxu0 0.0
  %178 = vmatpush1.msra.mxu0 0.0
  %179 = vmatprep.subr.mxu0 0.0
  %180 = vmatpush1.msra.mxu0 0.0
  %181 = vmatprep.subr.mxu0 0.0
  %182 = vmatpush1.msra.mxu0 0.0
  %183 = vmatprep.subr.mxu0 0.0
  %184 = vmatpush1.msra.mxu0 0.0
  %185 = vmatprep.subr.mxu0 0.0
  %186 = vmatpush1.msra.mxu0 0.0
  %187 = vmatprep.subr.mxu0 0.0
  %188 = vmatpush1.msra.mxu0 0.0
  %189 = vmatprep.subr.mxu0 0.0
  %190 = vmatpush1.msra.mxu0 0.0
  %191 = vmatprep.subr.mxu0 0.0
  %192 = vmatpush1.msra.mxu0 0.0
  %193 = vmatprep.subr.mxu0 0.0
  %194 = vmatpush1.msra.mxu0 0.0
  %195 = vmatprep.subr.mxu0 0.0
  %196 = vmatpush1.msra.mxu0 0.0
  %197 = vmatprep.subr.mxu0 0.0
  %198 = vmatpush1.msra.mxu0 0.0
  %199 = vmatprep.subr.mxu0 0.0
  %200 = vmatpush1.msra.mxu0 0.0
  %201 = vmatprep.subr.mxu0 0.0
  %202 = vmatpush1.msra.mxu0 0.0
  %203 = vmatprep.subr.mxu0 0.0
  %204 = vmatpush1.msra.mxu0 0.0
  %205 = vmatprep.subr.mxu0 0.0
  %206 = vmatpush1.msra.mxu0 0.0
  %207 = vmatprep.mubr.f32.mxu0 0.0
  %208 = vmatmul.mubr.f32.gmra.mrb[0].mxu0 %v138
  %v209 = vpop.f32.mrb[0].mxu0
  %v210 = vadd.f32 %v134, %v209
  %v211 = vpop.f32.mrb[0].mxu0
  %212 = vdwg.mxu0
  %213 = vrot.lane.b32.xlu0 %v53, 127
  %v214 = vpop.permute.xlu0 %213
  %v216 = vsel %vm45, %v214, 0.0
  %v218 = vsel %vm59, %v41, 0
  %v221 = vsel %vm63, %v216, 0
  %223 = vmatprep.subr.mxu0 0.0
  %224 = vmatpush1.msra.mxu0 %v221
  %225 = vmatprep.subr.mxu0 0.0
  %226 = vmatpush1.msra.mxu0 0.0
  %227 = vmatprep.subr.mxu0 0.0
  %228 = vmatpush1.msra.mxu0 0.0
  %229 = vmatprep.subr.mxu0 0.0
  %230 = vmatpush1.msra.mxu0 0.0
  %231 = vmatprep.subr.mxu0 0.0
  %232 = vmatpush1.msra.mxu0 0.0
  %233 = vmatprep.subr.mxu0 0.0
  %234 = vmatpush1.msra.mxu0 0.0
  %235 = vmatprep.subr.mxu0 0.0
  %236 = vmatpush1.msra.mxu0 0.0
  %237 = vmatprep.subr.mxu0 0.0
  %238 = vmatpush1.msra.mxu0 0.0
  %239 = vmatprep.subr.mxu0 0.0
  %240 = vmatpush1.msra.mxu0 0.0
  %241 = vmatprep.subr.mxu0 0.0
  %242 = vmatpush1.msra.mxu0 0.0
  %243 = vmatprep.subr.mxu0 0.0
  %244 = vmatpush1.msra.mxu0 0.0
  %245 = vmatprep.subr.mxu0 0.0
  %246 = vmatpush1.msra.mxu0 0.0
  %247 = vmatprep.subr.mxu0 0.0
  %248 = vmatpush1.msra.mxu0 0.0
  %249 = vmatprep.subr.mxu0 0.0
  %250 = vmatpush1.msra.mxu0 0.0
  %251 = vmatprep.subr.mxu0 0.0
  %252 = vmatpush1.msra.mxu0 0.0
  %253 = vmatprep.subr.mxu0 0.0
  %254 = vmatpush1.msra.mxu0 0.0
  %255 = vmatprep.subr.mxu0 0.0
  %256 = vmatpush1.msra.mxu0 0.0
  %257 = vmatprep.subr.mxu0 0.0
  %258 = vmatpush1.msra.mxu0 0.0
  %259 = vmatprep.subr.mxu0 0.0
  %260 = vmatpush1.msra.mxu0 0.0
  %261 = vmatprep.subr.mxu0 0.0
  %262 = vmatpush1.msra.mxu0 0.0
  %263 = vmatprep.subr.mxu0 0.0
  %264 = vmatpush1.msra.mxu0 0.0
  %265 = vmatprep.subr.mxu0 0.0
  %266 = vmatpush1.msra.mxu0 0.0
  %267 = vmatprep.subr.mxu0 0.0
  %268 = vmatpush1.msra.mxu0 0.0
  %269 = vmatprep.subr.mxu0 0.0
  %270 = vmatpush1.msra.mxu0 0.0
  %271 = vmatprep.subr.mxu0 0.0
  %272 = vmatpush1.msra.mxu0 0.0
  %273 = vmatprep.subr.mxu0 0.0
  %274 = vmatpush1.msra.mxu0 0.0
  %275 = vmatprep.subr.mxu0 0.0
  %276 = vmatpush1.msra.mxu0 0.0
  %277 = vmatprep.subr.mxu0 0.0
  %278 = vmatpush1.msra.mxu0 0.0
  %279 = vmatprep.subr.mxu0 0.0
  %280 = vmatpush1.msra.mxu0 0.0
  %281 = vmatprep.subr.mxu0 0.0
  %282 = vmatpush1.msra.mxu0 0.0
  %283 = vmatprep.subr.mxu0 0.0
  %284 = vmatpush1.msra.mxu0 0.0
  %285 = vmatprep.subr.mxu0 0.0
  %286 = vmatpush1.msra.mxu0 0.0
  %287 = vmatprep.mubr.f32.mxu0 0.0
  %288 = vmatmul.mubr.f32.gmra.mrb[0].mxu0 %v218
  %v289 = vpop.f32.mrb[0].mxu0
  %v290 = vadd.f32 0.0, %v289
  %v291 = vpop.f32.mrb[0].mxu0
  %292 = vdwg.mxu0
  %v293 = vadd.f32 %v210, %v290
  %vm294 = vcmask 130048
  %v295 = vsel %vm294, %v293, 0.0
  %296 = vadd.xlane.f32.xlu0 %v295
  %v297 = vpop.xlane.xlu0 %296
  %v298 = vmul.f32 %v293, %v293
  %v299 = vsel %vm294, %v298, 0.0
  %300 = vadd.xlane.f32.xlu0 %v299
  %v301 = vpop.xlane.xlu0 %300
  %s302 = scalar_lea.vmem %s30, 4
  %v303 = vld [vmem:[%s302] sm:$0xf]
  %304 = vrot.lane.b32.xlu0 %v303, 16
  %v305 = vpop.permute.xlu0 %304
  %v306 = vsel %vm47, %v305, %v303
  %307 = vrot.lane.b32.xlu0 %v306, 16
  %v308 = vpop.permute.xlu0 %307
  %v309 = vsel %vm47, %v308, %v303
  %311 = vrot.lane.b32.xlu0 %v309, 113
  %v312 = vpop.permute.xlu0 %311
  %v314 = vsel %vm44, %v312, 0.0
  %v316 = vsel %vm63, %v303, 0
  %318 = vmatprep.subr.mxu0 0.0
  %319 = vmatpush1.msra.mxu0 %v316
  %320 = vmatprep.subr.mxu0 0.0
  %321 = vmatpush1.msra.mxu0 0.0
  %322 = vmatprep.subr.mxu0 0.0
  %323 = vmatpush1.msra.mxu0 0.0
  %324 = vmatprep.subr.mxu0 0.0
  %325 = vmatpush1.msra.mxu0 0.0
  %326 = vmatprep.subr.mxu0 0.0
  %327 = vmatpush1.msra.mxu0 0.0
  %328 = vmatprep.subr.mxu0 0.0
  %329 = vmatpush1.msra.mxu0 0.0
  %330 = vmatprep.subr.mxu0 0.0
  %331 = vmatpush1.msra.mxu0 0.0
  %332 = vmatprep.subr.mxu0 0.0
  %333 = vmatpush1.msra.mxu0 0.0
  %334 = vmatprep.subr.mxu0 0.0
  %335 = vmatpush1.msra.mxu0 0.0
  %336 = vmatprep.subr.mxu0 0.0
  %337 = vmatpush1.msra.mxu0 0.0
  %338 = vmatprep.subr.mxu0 0.0
  %339 = vmatpush1.msra.mxu0 0.0
  %340 = vmatprep.subr.mxu0 0.0
  %341 = vmatpush1.msra.mxu0 0.0
  %342 = vmatprep.subr.mxu0 0.0
  %343 = vmatpush1.msra.mxu0 0.0
  %344 = vmatprep.subr.mxu0 0.0
  %345 = vmatpush1.msra.mxu0 0.0
  %346 = vmatprep.subr.mxu0 0.0
  %347 = vmatpush1.msra.mxu0 0.0
  %348 = vmatprep.subr.mxu0 0.0
  %349 = vmatpush1.msra.mxu0 0.0
  %350 = vmatprep.subr.mxu0 0.0
  %351 = vmatpush1.msra.mxu0 0.0
  %352 = vmatprep.subr.mxu0 0.0
  %353 = vmatpush1.msra.mxu0 0.0
  %354 = vmatprep.subr.mxu0 0.0
  %355 = vmatpush1.msra.mxu0 0.0
  %356 = vmatprep.subr.mxu0 0.0
  %357 = vmatpush1.msra.mxu0 0.0
  %358 = vmatprep.subr.mxu0 0.0
  %359 = vmatpush1.msra.mxu0 0.0
  %360 = vmatprep.subr.mxu0 0.0
  %361 = vmatpush1.msra.mxu0 0.0
  %362 = vmatprep.subr.mxu0 0.0
  %363 = vmatpush1.msra.mxu0 0.0
  %364 = vmatprep.subr.mxu0 0.0
  %365 = vmatpush1.msra.mxu0 0.0
  %366 = vmatprep.subr.mxu0 0.0
  %367 = vmatpush1.msra.mxu0 0.0
  %368 = vmatprep.subr.mxu0 0.0
  %369 = vmatpush1.msra.mxu0 0.0
  %370 = vmatprep.subr.mxu0 0.0
  %371 = vmatpush1.msra.mxu0 0.0
  %372 = vmatprep.subr.mxu0 0.0
  %373 = vmatpush1.msra.mxu0 0.0
  %374 = vmatprep.subr.mxu0 0.0
  %375 = vmatpush1.msra.mxu0 0.0
  %376 = vmatprep.subr.mxu0 0.0
  %377 = vmatpush1.msra.mxu0 0.0
  %378 = vmatprep.subr.mxu0 0.0
  %379 = vmatpush1.msra.mxu0 0.0
  %380 = vmatprep.subr.mxu0 0.0
  %381 = vmatpush1.msra.mxu0 0.0
  %382 = vmatprep.mubr.f32.mxu0 0.0
  %383 = vmatmul.mubr.f32.gmra.mrb[0].mxu0 %v61
  %v384 = vpop.f32.mrb[0].mxu0
  %v385 = vadd.f32 0.0, %v384
  %v386 = vpop.f32.mrb[0].mxu0
  %387 = vdwg.mxu0
  %v389 = vsel %vm63, %v314, 0
  %391 = vmatprep.subr.mxu0 0.0
  %392 = vmatpush1.msra.mxu0 %v389
  %393 = vmatprep.subr.mxu0 0.0
  %394 = vmatpush1.msra.mxu0 0.0
  %395 = vmatprep.subr.mxu0 0.0
  %396 = vmatpush1.msra.mxu0 0.0
  %397 = vmatprep.subr.mxu0 0.0
  %398 = vmatpush1.msra.mxu0 0.0
  %399 = vmatprep.subr.mxu0 0.0
  %400 = vmatpush1.msra.mxu0 0.0
  %401 = vmatprep.subr.mxu0 0.0
  %402 = vmatpush1.msra.mxu0 0.0
  %403 = vmatprep.subr.mxu0 0.0
  %404 = vmatpush1.msra.mxu0 0.0
  %405 = vmatprep.subr.mxu0 0.0
  %406 = vmatpush1.msra.mxu0 0.0
  %407 = vmatprep.subr.mxu0 0.0
  %408 = vmatpush1.msra.mxu0 0.0
  %409 = vmatprep.subr.mxu0 0.0
  %410 = vmatpush1.msra.mxu0 0.0
  %411 = vmatprep.subr.mxu0 0.0
  %412 = vmatpush1.msra.mxu0 0.0
  %413 = vmatprep.subr.mxu0 0.0
  %414 = vmatpush1.msra.mxu0 0.0
  %415 = vmatprep.subr.mxu0 0.0
  %416 = vmatpush1.msra.mxu0 0.0
  %417 = vmatprep.subr.mxu0 0.0
  %418 = vmatpush1.msra.mxu0 0.0
  %419 = vmatprep.subr.mxu0 0.0
  %420 = vmatpush1.msra.mxu0 0.0
  %421 = vmatprep.subr.mxu0 0.0
  %422 = vmatpush1.msra.mxu0 0.0
  %423 = vmatprep.subr.mxu0 0.0
  %424 = vmatpush1.msra.mxu0 0.0
  %425 = vmatprep.subr.mxu0 0.0
  %426 = vmatpush1.msra.mxu0 0.0
  %427 = vmatprep.subr.mxu0 0.0
  %428 = vmatpush1.msra.mxu0 0.0
  %429 = vmatprep.subr.mxu0 0.0
  %430 = vmatpush1.msra.mxu0 0.0
  %431 = vmatprep.subr.mxu0 0.0
  %432 = vmatpush1.msra.mxu0 0.0
  %433 = vmatprep.subr.mxu0 0.0
  %434 = vmatpush1.msra.mxu0 0.0
  %435 = vmatprep.subr.mxu0 0.0
  %436 = vmatpush1.msra.mxu0 0.0
  %437 = vmatprep.subr.mxu0 0.0
  %438 = vmatpush1.msra.mxu0 0.0
  %439 = vmatprep.subr.mxu0 0.0
  %440 = vmatpush1.msra.mxu0 0.0
  %441 = vmatprep.subr.mxu0 0.0
  %442 = vmatpush1.msra.mxu0 0.0
  %443 = vmatprep.subr.mxu0 0.0
  %444 = vmatpush1.msra.mxu0 0.0
  %445 = vmatprep.subr.mxu0 0.0
  %446 = vmatpush1.msra.mxu0 0.0
  %447 = vmatprep.subr.mxu0 0.0
  %448 = vmatpush1.msra.mxu0 0.0
  %449 = vmatprep.subr.mxu0 0.0
  %450 = vmatpush1.msra.mxu0 0.0
  %451 = vmatprep.subr.mxu0 0.0
  %452 = vmatpush1.msra.mxu0 0.0
  %453 = vmatprep.subr.mxu0 0.0
  %454 = vmatpush1.msra.mxu0 0.0
  %455 = vmatprep.mubr.f32.mxu0 0.0
  %456 = vmatmul.mubr.f32.gmra.mrb[0].mxu0 %v138
  %v457 = vpop.f32.mrb[0].mxu0
  %v458 = vadd.f32 %v385, %v457
  %v459 = vpop.f32.mrb[0].mxu0
  %460 = vdwg.mxu0
  %461 = vrot.lane.b32.xlu0 %v309, 127
  %v462 = vpop.permute.xlu0 %461
  %v464 = vsel %vm45, %v462, 0.0
  %v466 = vsel %vm63, %v464, 0
  %468 = vmatprep.subr.mxu0 0.0
  %469 = vmatpush1.msra.mxu0 %v466
  %470 = vmatprep.subr.mxu0 0.0
  %471 = vmatpush1.msra.mxu0 0.0
  %472 = vmatprep.subr.mxu0 0.0
  %473 = vmatpush1.msra.mxu0 0.0
  %474 = vmatprep.subr.mxu0 0.0
  %475 = vmatpush1.msra.mxu0 0.0
  %476 = vmatprep.subr.mxu0 0.0
  %477 = vmatpush1.msra.mxu0 0.0
  %478 = vmatprep.subr.mxu0 0.0
  %479 = vmatpush1.msra.mxu0 0.0
  %480 = vmatprep.subr.mxu0 0.0
  %481 = vmatpush1.msra.mxu0 0.0
  %482 = vmatprep.subr.mxu0 0.0
  %483 = vmatpush1.msra.mxu0 0.0
  %484 = vmatprep.subr.mxu0 0.0
  %485 = vmatpush1.msra.mxu0 0.0
  %486 = vmatprep.subr.mxu0 0.0
  %487 = vmatpush1.msra.mxu0 0.0
  %488 = vmatprep.subr.mxu0 0.0
  %489 = vmatpush1.msra.mxu0 0.0
  %490 = vmatprep.subr.mxu0 0.0
  %491 = vmatpush1.msra.mxu0 0.0
  %492 = vmatprep.subr.mxu0 0.0
  %493 = vmatpush1.msra.mxu0 0.0
  %494 = vmatprep.subr.mxu0 0.0
  %495 = vmatpush1.msra.mxu0 0.0
  %496 = vmatprep.subr.mxu0 0.0
  %497 = vmatpush1.msra.mxu0 0.0
  %498 = vmatprep.subr.mxu0 0.0
  %499 = vmatpush1.msra.mxu0 0.0
  %500 = vmatprep.subr.mxu0 0.0
  %501 = vmatpush1.msra.mxu0 0.0
  %502 = vmatprep.subr.mxu0 0.0
  %503 = vmatpush1.msra.mxu0 0.0
  %504 = vmatprep.subr.mxu0 0.0
  %505 = vmatpush1.msra.mxu0 0.0
  %506 = vmatprep.subr.mxu0 0.0
  %507 = vmatpush1.msra.mxu0 0.0
  %508 = vmatprep.subr.mxu0 0.0
  %509 = vmatpush1.msra.mxu0 0.0
  %510 = vmatprep.subr.mxu0 0.0
  %511 = vmatpush1.msra.mxu0 0.0
  %512 = vmatprep.subr.mxu0 0.0
  %513 = vmatpush1.msra.mxu0 0.0
  %514 = vmatprep.subr.mxu0 0.0
  %515 = vmatpush1.msra.mxu0 0.0
  %516 = vmatprep.subr.mxu0 0.0
  %517 = vmatpush1.msra.mxu0 0.0
  %518 = vmatprep.subr.mxu0 0.0
  %519 = vmatpush1.msra.mxu0 0.0
  %520 = vmatprep.subr.mxu0 0.0
  %521 = vmatpush1.msra.mxu0 0.0
  %522 = vmatprep.subr.mxu0 0.0
  %523 = vmatpush1.msra.mxu0 0.0
  %524 = vmatprep.subr.mxu0 0.0
  %525 = vmatpush1.msra.mxu0 0.0
  %526 = vmatprep.subr.mxu0 0.0
  %527 = vmatpush1.msra.mxu0 0.0
  %528 = vmatprep.subr.mxu0 0.0
  %529 = vmatpush1.msra.mxu0 0.0
  %530 = vmatprep.subr.mxu0 0.0
  %531 = vmatpush1.msra.mxu0 0.0
  %532 = vmatprep.mubr.f32.mxu0 0.0
  %533 = vmatmul.mubr.f32.gmra.mrb[0].mxu0 %v218
  %v534 = vpop.f32.mrb[0].mxu0
  %v535 = vadd.f32 0.0, %v534
  %v536 = vpop.f32.mrb[0].mxu0
  %537 = vdwg.mxu0
  %v538 = vadd.f32 %v458, %v535
  %v539 = vsel %vm294, %v538, 0.0
  %540 = vadd.xlane.f32.xlu0 %v539
  %v541 = vpop.xlane.xlu0 %540
  %v542 = vmul.f32 %v538, %v538
  %v543 = vsel %vm294, %v542, 0.0
  %544 = vadd.xlane.f32.xlu0 %v543
  %v545 = vpop.xlane.xlu0 %544
  %v546 = vadd.f32 %v297, %v541
  %v547 = vadd.f32 %v301, %v545
  %v548 = vld [vmem:[%s2] sm:$0xff]
  %vm549 = vcmask 7168
  %v550 = vsel %vm549, %v546, %v547
  %v551 = vadd.f32 %v548, %v550
  %vm552 = vcmask 15360
  %553 = vst.msk [vmem:[%s2] sm:$0xff] %vm552, %v551
  // Predicated region
  $region14: #{tpu_custom_call.1} parent=0 // pred_check
    _
  $region15: #{tpu_custom_call.1} parent=0 // pred_check_branch
    %555 = sbr.rel (0) target = $region17
  $region16: #{tpu_custom_call.1} parent=0 // pred_region
    _
  $region17: #{tpu_custom_call.1} parent=0 // pred_fallthru
    _
  // Predicated region
  $region18: #{tpu_custom_call.1} parent=0 // pred_check
    _
  $region19: #{tpu_custom_call.1} parent=0 // pred_check_branch
    %557 = sbr.rel (0) target = $region21
  $region20: #{tpu_custom_call.1} parent=0 // pred_region
    _
  $region21: #{tpu_custom_call.1} parent=0 // pred_fallthru
    _

</llo_original>
